<compile_context>
chip_gen: v7x
topology: tpu7x:2x2x1
jax: 0.10.0
libtpu: 0.0.40
codegen_flags: <defaults>
</compile_context>

<pallas_src>
import functools

import numpy as np
import jax
import jax.numpy as jnp
from jax.experimental import pallas as pl
from jax.experimental.pallas import tpu as pltpu


def _round_up(x, m):
    return ((x + m - 1) // m) * m


def _local_mlp_kernel(n_layers, g_ref, l_ref, f_ref, *refs):
    """refs = (w0_g, w0_l, w0_f, b0, w1, b1, ..., w_{L-1}, b_{L-1}, out_ref).

    Layout: activations / output are (batch_tile, features) with batch on the
    sublane axis; weights are (in, out); biases are (1, out) float32.
    """
    out_ref = refs[-1]
    w0_g, w0_l, w0_f, b0 = refs[0], refs[1], refs[2], refs[3]

    # Layer 0: implicit concat via split-row matmuls  cat(g,l,f) @ W0 = g@W0g + l@W0l + f@W0f.
    h = (
        jnp.dot(g_ref[...], w0_g[...], preferred_element_type=jnp.float32)
        + jnp.dot(l_ref[...], w0_l[...], preferred_element_type=jnp.float32)
        + jnp.dot(f_ref[...], w0_f[...], preferred_element_type=jnp.float32)
        + b0[...]
    )

    # Remaining layers: ReLU then Linear; no activation after the last layer.
    for li in range(1, n_layers):
        w = refs[4 + 2 * (li - 1)]
        b = refs[5 + 2 * (li - 1)]
        h = jnp.maximum(h, 0.0)
        h = (
            jnp.dot(h.astype(w.dtype), w[...], preferred_element_type=jnp.float32)
            + b[...]
        )

    out_ref[...] = h.astype(out_ref.dtype)


def local_mlp_forward(global_context, local_context, future_covariates, params,
                      global_context_size, local_context_size,
                      batch_tile=2048, compute_dtype=jnp.float32,
                      vmem_limit_bytes=32 * 1024 * 1024):
    """params: list of (W, b) with W shape (in, out), b shape (out,) (applied as
    x @ W + b, PyTorch-Linear equivalent).  Returns (B, n_quantiles) float32.

    compute_dtype=jnp.bfloat16 enables a reduced-precision bandwidth path for
    v6e/v7x (f32 accumulation kept); default f32 preserves exactness.
    """
    B = global_context.shape[0]
    n_layers = len(params)
    out_dim = params[-1][0].shape[1]
    gs, ls = global_context_size, local_context_size
    nf = future_covariates.shape[1]

    # --- batch tiling -------------------------------------------------------
    # Sublane axis => tile only needs to be a multiple of 8.  Sized against the
    # lane-padded VMEM footprint of (tb, feat) tiles (~5-6 KiB / row with double
    # buffering), so the default 2048 rows is ~11 MiB: under the 32 MiB scoped
    # limit we request (and under v7x's 64 MiB physical VMEM).
    tb = max(8, min(_round_up(batch_tile, 8), _round_up(B, 8)))
    n_tiles = pl.cdiv(B, tb)
    if n_tiles == 1 and B >= 256:
        # Give v7x's second TensorCore work on the "parallel" batch axis.
        tb = _round_up(pl.cdiv(B, 2), 8)
        n_tiles = pl.cdiv(B, tb)
    grid = (n_tiles,)

    # --- operands (no layout copies; cast only if a non-native dtype is asked) ----
    def maybe_cast(x):
        return x if x.dtype == compute_dtype else x.astype(compute_dtype)

    g = maybe_cast(global_context)
    l = maybe_cast(local_context)
    f = maybe_cast(future_covariates)

    # First-layer weight split into the row blocks matching [global | local | future].
    w0, b0 = params[0]
    w0 = w0.astype(compute_dtype)
    flat_params = [
        w0[:gs, :],
        w0[gs:gs + ls, :],
        w0[gs + ls:, :],
        b0.reshape(1, -1).astype(jnp.float32),
    ]
    for (w, b) in params[1:]:
        flat_params.append(w.astype(compute_dtype))
        flat_params.append(b.reshape(1, -1).astype(jnp.float32))

    def act_spec(feat):
        # Tile the batch (sublane) axis; the feature axis is the full (small) dim.
        return pl.BlockSpec((tb, feat), lambda i: (i, 0))

    def resident_spec(shape):
        # Constant block index -> weights/biases stay VMEM-resident across the grid.
        return pl.BlockSpec(shape, lambda i: (0, 0))

    in_specs = (
        [act_spec(gs), act_spec(ls), act_spec(nf)]
        + [resident_spec(p.shape) for p in flat_params]
    )
    out_spec = pl.BlockSpec((tb, out_dim), lambda i: (i, 0))

    kernel = functools.partial(_local_mlp_kernel, n_layers)

    out = pl.pallas_call(
        kernel,
        out_shape=jax.ShapeDtypeStruct((B, out_dim), jnp.float32),
        grid_spec=pltpu.PrefetchScalarGridSpec(
            num_scalar_prefetch=0,
            grid=grid,
            in_specs=in_specs,
            out_specs=out_spec,
        ),
        compiler_params=pltpu.CompilerParams(
            # Batch tiles are independent -> parallel (lets v7x use both TCs).
            dimension_semantics=("parallel",),
            # Explicit limit so v5e (16 MiB scoped default) accepts the larger tiles.
            vmem_limit_bytes=vmem_limit_bytes,
        ),
    )(g, l, f, *flat_params)

    return out


def _reference_forward(g, l, f, params):
    x = jnp.concatenate([g, l, f], axis=1)
    n_layers = len(params)
    for li, (w, b) in enumerate(params):
        x = x @ w + b
        if li < n_layers - 1:
            x = jnp.maximum(x, 0.0)
    return x


if __name__ == "__main__":
    # Module hyperparameters (small, deterministic).
    global_context_size = 8
    local_context_size = 8
    n_future_covariates = 4
    n_quantiles = 3
    n_local_layers = 3

    in_size = global_context_size + local_context_size + n_future_covariates
    layer_sizes = np.linspace(in_size, n_quantiles, n_local_layers, dtype=int)
    # Linear layer dims: in_size -> layer_sizes[0] -> ... -> layer_sizes[-1]
    dims = [in_size] + list(int(s) for s in layer_sizes)

    key = jax.random.PRNGKey(0)
    batch = 16

    # Deterministic parameter init (fan-in scaled normal), weights stored (in, out).
    params = []
    for li in range(len(dims) - 1):
        key, kw, kb = jax.random.split(key, 3)
        fan_in, fan_out = dims[li], dims[li + 1]
        w = jax.random.normal(kw, (fan_in, fan_out), jnp.float32) / np.sqrt(fan_in)
        b = jax.random.normal(kb, (fan_out,), jnp.float32) * 0.01
        params.append((w, b))

    key, k1, k2, k3 = jax.random.split(key, 4)
    global_context = jax.random.normal(k1, (batch, global_context_size), jnp.float32)
    local_context = jax.random.normal(k2, (batch, local_context_size), jnp.float32)
    future_covariates = jax.random.normal(
        k3, (batch, n_future_covariates), jnp.float32
    )

    out = local_mlp_forward(
        global_context, local_context, future_covariates, params,
        global_context_size, local_context_size,
    )
    out = jax.block_until_ready(out)

    ref = _reference_forward(global_context, local_context, future_covariates, params)
    assert out.shape == (batch, n_quantiles)
    np.testing.assert_allclose(np.asarray(out), np.asarray(ref), rtol=1e-5, atol=1e-5)

    print("KERNEL_OK")
</pallas_src>

<mosaic_0001>
module attributes {stable_mosaic.version = 11 : i64} {
  func.func @_local_mlp_kernel(%arg0: i32, %arg1: memref<16x8xf32, #tpu.memory_space<vmem>>, %arg2: memref<16x8xf32, #tpu.memory_space<vmem>>, %arg3: memref<16x4xf32, #tpu.memory_space<vmem>>, %arg4: memref<8x20xf32, #tpu.memory_space<vmem>>, %arg5: memref<8x20xf32, #tpu.memory_space<vmem>>, %arg6: memref<4x20xf32, #tpu.memory_space<vmem>>, %arg7: memref<1x20xf32, #tpu.memory_space<vmem>>, %arg8: memref<20x11xf32, #tpu.memory_space<vmem>>, %arg9: memref<1x11xf32, #tpu.memory_space<vmem>>, %arg10: memref<11x3xf32, #tpu.memory_space<vmem>>, %arg11: memref<1x3xf32, #tpu.memory_space<vmem>>, %arg12: memref<16x3xf32, #tpu.memory_space<vmem>>) attributes {dimension_semantics = [#tpu.dimension_semantics<parallel>], iteration_bounds = array<i64: 1>, scalar_prefetch = 0 : i64, scratch_operands = 0 : i64, tpu.core_type = #tpu.core_type<tc>, window_params = [{transform_indices = @transform_0, window_bounds = array<i64: 16, 8>}, {transform_indices = @transform_1, window_bounds = array<i64: 16, 8>}, {transform_indices = @transform_2, window_bounds = array<i64: 16, 4>}, {pipeline_mode = #tpu.pipeline_mode<synchronous>, transform_indices = @transform_3, window_bounds = array<i64: 8, 20>}, {pipeline_mode = #tpu.pipeline_mode<synchronous>, transform_indices = @transform_4, window_bounds = array<i64: 8, 20>}, {pipeline_mode = #tpu.pipeline_mode<synchronous>, transform_indices = @transform_5, window_bounds = array<i64: 4, 20>}, {pipeline_mode = #tpu.pipeline_mode<synchronous>, transform_indices = @transform_6, window_bounds = array<i64: 1, 20>}, {pipeline_mode = #tpu.pipeline_mode<synchronous>, transform_indices = @transform_7, window_bounds = array<i64: 20, 11>}, {pipeline_mode = #tpu.pipeline_mode<synchronous>, transform_indices = @transform_8, window_bounds = array<i64: 1, 11>}, {pipeline_mode = #tpu.pipeline_mode<synchronous>, transform_indices = @transform_9, window_bounds = array<i64: 11, 3>}, {pipeline_mode = #tpu.pipeline_mode<synchronous>, transform_indices = @transform_10, window_bounds = array<i64: 1, 3>}, {transform_indices = @transform_11, window_bounds = array<i64: 16, 3>}]} {
    %c0 = arith.constant 0 : index
    %c0_0 = arith.constant 0 : index
    %0 = vector.load %arg1[%c0, %c0_0] : memref<16x8xf32, #tpu.memory_space<vmem>>, vector<16x8xf32>
    %c0_1 = arith.constant 0 : index
    %c0_2 = arith.constant 0 : index
    %1 = vector.load %arg4[%c0_1, %c0_2] : memref<8x20xf32, #tpu.memory_space<vmem>>, vector<8x20xf32>
    %cst = arith.constant dense<0.000000e+00> : vector<16x20xf32>
    %2 = tpu.matmul %0, %1, %cst {dimension_numbers = #tpu.dot_dimension_numbers<[1], [0], [0], [1], [0, 0, 1, 1], [], []>} : vector<16x8xf32>, vector<8x20xf32>, vector<16x20xf32> -> vector<16x20xf32>
    %c0_3 = arith.constant 0 : index
    %c0_4 = arith.constant 0 : index
    %3 = vector.load %arg2[%c0_3, %c0_4] : memref<16x8xf32, #tpu.memory_space<vmem>>, vector<16x8xf32>
    %c0_5 = arith.constant 0 : index
    %c0_6 = arith.constant 0 : index
    %4 = vector.load %arg5[%c0_5, %c0_6] : memref<8x20xf32, #tpu.memory_space<vmem>>, vector<8x20xf32>
    %cst_7 = arith.constant dense<0.000000e+00> : vector<16x20xf32>
    %5 = tpu.matmul %3, %4, %cst_7 {dimension_numbers = #tpu.dot_dimension_numbers<[1], [0], [0], [1], [0, 0, 1, 1], [], []>} : vector<16x8xf32>, vector<8x20xf32>, vector<16x20xf32> -> vector<16x20xf32>
    %6 = arith.addf %2, %5 : vector<16x20xf32>
    %c0_8 = arith.constant 0 : index
    %c0_9 = arith.constant 0 : index
    %7 = vector.load %arg3[%c0_8, %c0_9] : memref<16x4xf32, #tpu.memory_space<vmem>>, vector<16x4xf32>
    %c0_10 = arith.constant 0 : index
    %c0_11 = arith.constant 0 : index
    %8 = vector.load %arg6[%c0_10, %c0_11] : memref<4x20xf32, #tpu.memory_space<vmem>>, vector<4x20xf32>
    %cst_12 = arith.constant dense<0.000000e+00> : vector<16x20xf32>
    %9 = tpu.matmul %7, %8, %cst_12 {dimension_numbers = #tpu.dot_dimension_numbers<[1], [0], [0], [1], [0, 0, 1, 1], [], []>} : vector<16x4xf32>, vector<4x20xf32>, vector<16x20xf32> -> vector<16x20xf32>
    %10 = arith.addf %6, %9 : vector<16x20xf32>
    %c0_13 = arith.constant 0 : index
    %c0_14 = arith.constant 0 : index
    %11 = vector.load %arg7[%c0_13, %c0_14] : memref<1x20xf32, #tpu.memory_space<vmem>>, vector<1x20xf32>
    %12 = vector.broadcast %11 : vector<1x20xf32> to vector<16x20xf32>
    %13 = arith.addf %10, %12 : vector<16x20xf32>
    %cst_15 = arith.constant 0.000000e+00 : f32
    %14 = vector.broadcast %cst_15 : f32 to vector<16x20xf32>
    %15 = arith.maximumf %13, %14 : vector<16x20xf32>
    %c0_16 = arith.constant 0 : index
    %c0_17 = arith.constant 0 : index
    %16 = vector.load %arg8[%c0_16, %c0_17] : memref<20x11xf32, #tpu.memory_space<vmem>>, vector<20x11xf32>
    %cst_18 = arith.constant dense<0.000000e+00> : vector<16x11xf32>
    %17 = tpu.matmul %15, %16, %cst_18 {dimension_numbers = #tpu.dot_dimension_numbers<[1], [0], [0], [1], [0, 0, 1, 1], [], []>} : vector<16x20xf32>, vector<20x11xf32>, vector<16x11xf32> -> vector<16x11xf32>
    %c0_19 = arith.constant 0 : index
    %c0_20 = arith.constant 0 : index
    %18 = vector.load %arg9[%c0_19, %c0_20] : memref<1x11xf32, #tpu.memory_space<vmem>>, vector<1x11xf32>
    %19 = vector.broadcast %18 : vector<1x11xf32> to vector<16x11xf32>
    %20 = arith.addf %17, %19 : vector<16x11xf32>
    %cst_21 = arith.constant 0.000000e+00 : f32
    %21 = vector.broadcast %cst_21 : f32 to vector<16x11xf32>
    %22 = arith.maximumf %20, %21 : vector<16x11xf32>
    %c0_22 = arith.constant 0 : index
    %c0_23 = arith.constant 0 : index
    %23 = vector.load %arg10[%c0_22, %c0_23] : memref<11x3xf32, #tpu.memory_space<vmem>>, vector<11x3xf32>
    %cst_24 = arith.constant dense<0.000000e+00> : vector<16x3xf32>
    %24 = tpu.matmul %22, %23, %cst_24 {dimension_numbers = #tpu.dot_dimension_numbers<[1], [0], [0], [1], [0, 0, 1, 1], [], []>} : vector<16x11xf32>, vector<11x3xf32>, vector<16x3xf32> -> vector<16x3xf32>
    %c0_25 = arith.constant 0 : index
    %c0_26 = arith.constant 0 : index
    %25 = vector.load %arg11[%c0_25, %c0_26] : memref<1x3xf32, #tpu.memory_space<vmem>>, vector<1x3xf32>
    %26 = vector.broadcast %25 : vector<1x3xf32> to vector<16x3xf32>
    %27 = arith.addf %24, %26 : vector<16x3xf32>
    %c0_27 = arith.constant 0 : index
    %c0_28 = arith.constant 0 : index
    %28 = vector.load %arg12[%c0_27, %c0_28] : memref<16x3xf32, #tpu.memory_space<vmem>>, vector<16x3xf32>
    tpu.vector_store %arg12[%c0_27, %c0_28], %27 {strides = array<i32>} : memref<16x3xf32, #tpu.memory_space<vmem>>, vector<16x3xf32>,
    return
  }
  func.func @transform_0(%arg0: i32) -> (i32, i32) {
    %c0_i32 = arith.constant 0 : i32
    %c0_i32_0 = arith.constant 0 : i32
    return %arg0, %c0_i32 : i32, i32
  }
  func.func @transform_1(%arg0: i32) -> (i32, i32) {
    %c0_i32 = arith.constant 0 : i32
    %c0_i32_0 = arith.constant 0 : i32
    return %arg0, %c0_i32 : i32, i32
  }
  func.func @transform_2(%arg0: i32) -> (i32, i32) {
    %c0_i32 = arith.constant 0 : i32
    %c0_i32_0 = arith.constant 0 : i32
    return %arg0, %c0_i32 : i32, i32
  }
  func.func @transform_3(%arg0: i32) -> (i32, i32) {
    %c0_i32 = arith.constant 0 : i32
    %c0_i32_0 = arith.constant 0 : i32
    %c0_i32_1 = arith.constant 0 : i32
    return %c0_i32, %c0_i32_0 : i32, i32
  }
  func.func @transform_4(%arg0: i32) -> (i32, i32) {
    %c0_i32 = arith.constant 0 : i32
    %c0_i32_0 = arith.constant 0 : i32
    %c0_i32_1 = arith.constant 0 : i32
    return %c0_i32, %c0_i32_0 : i32, i32
  }
  func.func @transform_5(%arg0: i32) -> (i32, i32) {
    %c0_i32 = arith.constant 0 : i32
    %c0_i32_0 = arith.constant 0 : i32
    %c0_i32_1 = arith.constant 0 : i32
    return %c0_i32, %c0_i32_0 : i32, i32
  }
  func.func @transform_6(%arg0: i32) -> (i32, i32) {
    %c0_i32 = arith.constant 0 : i32
    %c0_i32_0 = arith.constant 0 : i32
    %c0_i32_1 = arith.constant 0 : i32
    return %c0_i32, %c0_i32_0 : i32, i32
  }
  func.func @transform_7(%arg0: i32) -> (i32, i32) {
    %c0_i32 = arith.constant 0 : i32
    %c0_i32_0 = arith.constant 0 : i32
    %c0_i32_1 = arith.constant 0 : i32
    return %c0_i32, %c0_i32_0 : i32, i32
  }
  func.func @transform_8(%arg0: i32) -> (i32, i32) {
    %c0_i32 = arith.constant 0 : i32
    %c0_i32_0 = arith.constant 0 : i32
    %c0_i32_1 = arith.constant 0 : i32
    return %c0_i32, %c0_i32_0 : i32, i32
  }
  func.func @transform_9(%arg0: i32) -> (i32, i32) {
    %c0_i32 = arith.constant 0 : i32
    %c0_i32_0 = arith.constant 0 : i32
    %c0_i32_1 = arith.constant 0 : i32
    return %c0_i32, %c0_i32_0 : i32, i32
  }
  func.func @transform_10(%arg0: i32) -> (i32, i32) {
    %c0_i32 = arith.constant 0 : i32
    %c0_i32_0 = arith.constant 0 : i32
    %c0_i32_1 = arith.constant 0 : i32
    return %c0_i32, %c0_i32_0 : i32, i32
  }
  func.func @transform_11(%arg0: i32) -> (i32, i32) {
    %c0_i32 = arith.constant 0 : i32
    %c0_i32_0 = arith.constant 0 : i32
    return %arg0, %c0_i32 : i32, i32
  }
}

</mosaic_0001>

<llo_original>
// kernel: tpu_custom_call.1
$region0: #{tpu_custom_call.1}
  #allocation0 [shape = 'u32[]', space=smem, size = 0x4, offset = 0x4, fixed_abs, tag = 'smem constant byte address 0x4 - core index']
  #allocation1 [shape = 'u32[144,128]{1,0:T(1,128)}', space=vmem, size = 0x12000, scoped, tag = 'internal scratch']
  %s0 = inlined_call_operand.vmem [shape: f32[16,8], index: 0, kind: input, shape index: {}]
  %s1 = inlined_call_operand.vmem [shape: f32[16,8], index: 1, kind: input, shape index: {}]
  %s2 = inlined_call_operand.vmem [shape: f32[16,4], index: 2, kind: input, shape index: {}]
  %s3 = inlined_call_operand.vmem [shape: f32[8,20], index: 3, kind: input, shape index: {}]
  %s4 = inlined_call_operand.vmem [shape: f32[8,20], index: 4, kind: input, shape index: {}]
  %s5 = inlined_call_operand.vmem [shape: f32[4,20], index: 5, kind: input, shape index: {}]
  %s6 = inlined_call_operand.vmem [shape: f32[1,20], index: 6, kind: input, shape index: {}]
  %s7 = inlined_call_operand.vmem [shape: f32[20,11], index: 7, kind: input, shape index: {}]
  %s8 = inlined_call_operand.vmem [shape: f32[1,11], index: 8, kind: input, shape index: {}]
  %s9 = inlined_call_operand.vmem [shape: f32[11,3], index: 9, kind: input, shape index: {}]
  %s10 = inlined_call_operand.vmem [shape: f32[1,3], index: 10, kind: input, shape index: {}]
  %s11 = inlined_call_operand.vmem [shape: f32[16,3], index: 11, kind: output, shape index: {}]
  %s12 = sld [smem:[#allocation0]]
  $region54: #{tpu_custom_call.1} parent=0
    _
  %s14 = ssub.s32 1, %s12
  %s15 = scalar_select 0, %s14, %s12
  // Predicated region
  $region2: #{tpu_custom_call.1} parent=0 // pred_check
    _
  $region3: #{tpu_custom_call.1} parent=0 // pred_check_branch
    %17 = sbr.rel (0) target = $region5
  $region4: #{tpu_custom_call.1} parent=0 // pred_region
    _
  $region5: #{tpu_custom_call.1} parent=0 // pred_fallthru
    _
  // Predicated region
  $region6: #{tpu_custom_call.1} parent=0 // pred_check
    _
  $region7: #{tpu_custom_call.1} parent=0 // pred_check_branch
    %19 = sbr.rel (0) target = $region9
  $region8: #{tpu_custom_call.1} parent=0 // pred_region
    _
  $region9: #{tpu_custom_call.1} parent=0 // pred_fallthru
    _
  // Predicated region
  $region10: #{tpu_custom_call.1} parent=0 // pred_check
    _
  $region11: #{tpu_custom_call.1} parent=0 // pred_check_branch
    %21 = sbr.rel (0) target = $region13
  $region12: #{tpu_custom_call.1} parent=0 // pred_region
    _
  $region13: #{tpu_custom_call.1} parent=0 // pred_fallthru
    _
  // Predicated region
  $region14: #{tpu_custom_call.1} parent=0 // pred_check
    _
  $region15: #{tpu_custom_call.1} parent=0 // pred_check_branch
    %23 = sbr.rel (0) target = $region17
  $region16: #{tpu_custom_call.1} parent=0 // pred_region
    _
  $region17: #{tpu_custom_call.1} parent=0 // pred_fallthru
    _
  // Predicated region
  $region18: #{tpu_custom_call.1} parent=0 // pred_check
    _
  $region19: #{tpu_custom_call.1} parent=0 // pred_check_branch
    %25 = sbr.rel (0) target = $region21
  $region20: #{tpu_custom_call.1} parent=0 // pred_region
    _
  $region21: #{tpu_custom_call.1} parent=0 // pred_fallthru
    _
  // Predicated region
  $region22: #{tpu_custom_call.1} parent=0 // pred_check
    _
  $region23: #{tpu_custom_call.1} parent=0 // pred_check_branch
    %27 = sbr.rel (0) target = $region25
  $region24: #{tpu_custom_call.1} parent=0 // pred_region
    _
  $region25: #{tpu_custom_call.1} parent=0 // pred_fallthru
    _
  // Predicated region
  $region26: #{tpu_custom_call.1} parent=0 // pred_check
    _
  $region27: #{tpu_custom_call.1} parent=0 // pred_check_branch
    %29 = sbr.rel (0) target = $region29
  $region28: #{tpu_custom_call.1} parent=0 // pred_region
    _
  $region29: #{tpu_custom_call.1} parent=0 // pred_fallthru
    _
  // Predicated region
  $region30: #{tpu_custom_call.1} parent=0 // pred_check
    _
  $region31: #{tpu_custom_call.1} parent=0 // pred_check_branch
    %31 = sbr.rel (0) target = $region33
  $region32: #{tpu_custom_call.1} parent=0 // pred_region
    _
  $region33: #{tpu_custom_call.1} parent=0 // pred_fallthru
    _
  // Predicated region
  $region34: #{tpu_custom_call.1} parent=0 // pred_check
    _
  $region35: #{tpu_custom_call.1} parent=0 // pred_check_branch
    %33 = sbr.rel (0) target = $region37
  $region36: #{tpu_custom_call.1} parent=0 // pred_region
    _
  $region37: #{tpu_custom_call.1} parent=0 // pred_fallthru
    _
  // Predicated region
  $region38: #{tpu_custom_call.1} parent=0 // pred_check
    _
  $region39: #{tpu_custom_call.1} parent=0 // pred_check_branch
    %35 = sbr.rel (0) target = $region41
  $region40: #{tpu_custom_call.1} parent=0 // pred_region
    _
  $region41: #{tpu_custom_call.1} parent=0 // pred_fallthru
    _
  // Predicated region
  $region42: #{tpu_custom_call.1} parent=0 // pred_check
    _
  $region43: #{tpu_custom_call.1} parent=0 // pred_check_branch
    %37 = sbr.rel (0) target = $region45
  $region44: #{tpu_custom_call.1} parent=0 // pred_region
    _
  $region45: #{tpu_custom_call.1} parent=0 // pred_fallthru
    _
  %v38 = vld [vmem:[%s0] sm:$0xff]
  %v39 = vld [vmem:[%s0 + $0x8] sm:$0xff]
  %v40 = vld [vmem:[%s3] sm:$0xff]
  %v41 = vld [vmem:[%s1] sm:$0xff]
  %v42 = vld [vmem:[%s1 + $0x8] sm:$0xff]
  %v43 = vld [vmem:[%s4] sm:$0xff]
  %vm44 = vcmask 64512
  %v46 = vsel %vm44, %v41, 0
  %v49 = vsel %vm44, %v42, 0
  %51 = vmatprep.subr.mxu0 0.0
  %52 = vmatpush1.msra.mxu0 %v43
  %53 = vmatprep.subr.mxu0 0.0
  %54 = vmatpush1.msra.mxu0 0.0
  %55 = vmatprep.subr.mxu0 0.0
  %56 = vmatpush1.msra.mxu0 0.0
  %57 = vmatprep.subr.mxu0 0.0
  %58 = vmatpush1.msra.mxu0 0.0
  %59 = vmatprep.subr.mxu0 0.0
  %60 = vmatpush1.msra.mxu0 0.0
  %61 = vmatprep.subr.mxu0 0.0
  %62 = vmatpush1.msra.mxu0 0.0
  %63 = vmatprep.subr.mxu0 0.0
  %64 = vmatpush1.msra.mxu0 0.0
  %65 = vmatprep.subr.mxu0 0.0
  %66 = vmatpush1.msra.mxu0 0.0
  %67 = vmatprep.subr.mxu0 0.0
  %68 = vmatpush1.msra.mxu0 0.0
  %69 = vmatprep.subr.mxu0 0.0
  %70 = vmatpush1.msra.mxu0 0.0
  %71 = vmatprep.subr.mxu0 0.0
  %72 = vmatpush1.msra.mxu0 0.0
  %73 = vmatprep.subr.mxu0 0.0
  %74 = vmatpush1.msra.mxu0 0.0
  %75 = vmatprep.subr.mxu0 0.0
  %76 = vmatpush1.msra.mxu0 0.0
  %77 = vmatprep.subr.mxu0 0.0
  %78 = vmatpush1.msra.mxu0 0.0
  %79 = vmatprep.subr.mxu0 0.0
  %80 = vmatpush1.msra.mxu0 0.0
  %81 = vmatprep.subr.mxu0 0.0
  %82 = vmatpush1.msra.mxu0 0.0
  %83 = vmatprep.subr.mxu0 0.0
  %84 = vmatpush1.msra.mxu0 0.0
  %85 = vmatprep.subr.mxu0 0.0
  %86 = vmatpush1.msra.mxu0 0.0
  %87 = vmatprep.subr.mxu0 0.0
  %88 = vmatpush1.msra.mxu0 0.0
  %89 = vmatprep.subr.mxu0 0.0
  %90 = vmatpush1.msra.mxu0 0.0
  %91 = vmatprep.subr.mxu0 0.0
  %92 = vmatpush1.msra.mxu0 0.0
  %93 = vmatprep.subr.mxu0 0.0
  %94 = vmatpush1.msra.mxu0 0.0
  %95 = vmatprep.subr.mxu0 0.0
  %96 = vmatpush1.msra.mxu0 0.0
  %97 = vmatprep.subr.mxu0 0.0
  %98 = vmatpush1.msra.mxu0 0.0
  %99 = vmatprep.subr.mxu0 0.0
  %100 = vmatpush1.msra.mxu0 0.0
  %101 = vmatprep.subr.mxu0 0.0
  %102 = vmatpush1.msra.mxu0 0.0
  %103 = vmatprep.subr.mxu0 0.0
  %104 = vmatpush1.msra.mxu0 0.0
  %105 = vmatprep.subr.mxu0 0.0
  %106 = vmatpush1.msra.mxu0 0.0
  %107 = vmatprep.subr.mxu0 0.0
  %108 = vmatpush1.msra.mxu0 0.0
  %109 = vmatprep.subr.mxu0 0.0
  %110 = vmatpush1.msra.mxu0 0.0
  %111 = vmatprep.subr.mxu0 0.0
  %112 = vmatpush1.msra.mxu0 0.0
  %113 = vmatprep.subr.mxu0 0.0
  %114 = vmatpush1.msra.mxu0 0.0
  %115 = vmatprep.mubr.f32.mxu0 0.0
  %116 = vmatmul.mubr.f32.gmra.mrb[0].mxu0 %v46
  %v117 = vpop.f32.mrb[0].mxu0
  %v118 = vadd.f32 0.0, %v117
  %v119 = vpop.f32.mrb[0].mxu0
  %120 = vmatprep.mubr.f32.mxu0 0.0
  %121 = vmatmul.mubr.f32.gmra.mrb[0].mxu0 %v49
  %v122 = vpop.f32.mrb[0].mxu0
  %v123 = vadd.f32 0.0, %v122
  %v124 = vpop.f32.mrb[0].mxu0
  %125 = vdwg.mxu0
  %v127 = vsel %vm44, %v38, 0
  %v130 = vsel %vm44, %v39, 0
  %132 = vmatprep.subr.mxu0 0.0
  %133 = vmatpush1.msra.mxu0 %v40
  %134 = vmatprep.subr.mxu0 0.0
  %135 = vmatpush1.msra.mxu0 0.0
  %136 = vmatprep.subr.mxu0 0.0
  %137 = vmatpush1.msra.mxu0 0.0
  %138 = vmatprep.subr.mxu0 0.0
  %139 = vmatpush1.msra.mxu0 0.0
  %140 = vmatprep.subr.mxu0 0.0
  %141 = vmatpush1.msra.mxu0 0.0
  %142 = vmatprep.subr.mxu0 0.0
  %143 = vmatpush1.msra.mxu0 0.0
  %144 = vmatprep.subr.mxu0 0.0
  %145 = vmatpush1.msra.mxu0 0.0
  %146 = vmatprep.subr.mxu0 0.0
  %147 = vmatpush1.msra.mxu0 0.0
  %148 = vmatprep.subr.mxu0 0.0
  %149 = vmatpush1.msra.mxu0 0.0
  %150 = vmatprep.subr.mxu0 0.0
  %151 = vmatpush1.msra.mxu0 0.0
  %152 = vmatprep.subr.mxu0 0.0
  %153 = vmatpush1.msra.mxu0 0.0
  %154 = vmatprep.subr.mxu0 0.0
  %155 = vmatpush1.msra.mxu0 0.0
  %156 = vmatprep.subr.mxu0 0.0
  %157 = vmatpush1.msra.mxu0 0.0
  %158 = vmatprep.subr.mxu0 0.0
  %159 = vmatpush1.msra.mxu0 0.0
  %160 = vmatprep.subr.mxu0 0.0
  %161 = vmatpush1.msra.mxu0 0.0
  %162 = vmatprep.subr.mxu0 0.0
  %163 = vmatpush1.msra.mxu0 0.0
  %164 = vmatprep.subr.mxu0 0.0
  %165 = vmatpush1.msra.mxu0 0.0
  %166 = vmatprep.subr.mxu0 0.0
  %167 = vmatpush1.msra.mxu0 0.0
  %168 = vmatprep.subr.mxu0 0.0
  %169 = vmatpush1.msra.mxu0 0.0
  %170 = vmatprep.subr.mxu0 0.0
  %171 = vmatpush1.msra.mxu0 0.0
  %172 = vmatprep.subr.mxu0 0.0
  %173 = vmatpush1.msra.mxu0 0.0
  %174 = vmatprep.subr.mxu0 0.0
  %175 = vmatpush1.msra.mxu0 0.0
  %176 = vmatprep.subr.mxu0 0.0
  %177 = vmatpush1.msra.mxu0 0.0
  %178 = vmatprep.subr.mxu0 0.0
  %179 = vmatpush1.msra.mxu0 0.0
  %180 = vmatprep.subr.mxu0 0.0
  %181 = vmatpush1.msra.mxu0 0.0
  %182 = vmatprep.subr.mxu0 0.0
  %183 = vmatpush1.msra.mxu0 0.0
  %184 = vmatprep.subr.mxu0 0.0
  %185 = vmatpush1.msra.mxu0 0.0
  %186 = vmatprep.subr.mxu0 0.0
  %187 = vmatpush1.msra.mxu0 0.0
  %188 = vmatprep.subr.mxu0 0.0
  %189 = vmatpush1.msra.mxu0 0.0
  %190 = vmatprep.subr.mxu0 0.0
  %191 = vmatpush1.msra.mxu0 0.0
  %192 = vmatprep.subr.mxu0 0.0
  %193 = vmatpush1.msra.mxu0 0.0
  %194 = vmatprep.subr.mxu0 0.0
  %195 = vmatpush1.msra.mxu0 0.0
  %196 = vmatprep.mubr.f32.mxu0 0.0
  %197 = vmatmul.mubr.f32.gmra.mrb[0].mxu0 %v127
  %v198 = vpop.f32.mrb[0].mxu0
  %v199 = vadd.f32 %v118, %v198
  %v200 = vpop.f32.mrb[0].mxu0
  %201 = vmatprep.mubr.f32.mxu0 0.0
  %202 = vmatmul.mubr.f32.gmra.mrb[0].mxu0 %v130
  %v203 = vpop.f32.mrb[0].mxu0
  %v204 = vadd.f32 %v123, %v203
  %v205 = vpop.f32.mrb[0].mxu0
  %206 = vdwg.mxu0
  %v207 = vld [vmem:[%s2] sm:$0xff]
  %v208 = vld [vmem:[%s2 + $0x8] sm:$0xff]
  %v209 = vld [vmem:[%s5] sm:$0xf]
  %vm210 = vcmask 31744
  %v212 = vsel %vm210, %v207, 0
  %v215 = vsel %vm210, %v208, 0
  %vm217 = vcmask 1043456
  %v219 = vsel %vm217, %v209, 0
  %221 = vmatprep.subr.mxu0 0.0
  %222 = vmatpush1.msra.mxu0 %v219
  %223 = vmatprep.subr.mxu0 0.0
  %224 = vmatpush1.msra.mxu0 0.0
  %225 = vmatprep.subr.mxu0 0.0
  %226 = vmatpush1.msra.mxu0 0.0
  %227 = vmatprep.subr.mxu0 0.0
  %228 = vmatpush1.msra.mxu0 0.0
  %229 = vmatprep.subr.mxu0 0.0
  %230 = vmatpush1.msra.mxu0 0.0
  %231 = vmatprep.subr.mxu0 0.0
  %232 = vmatpush1.msra.mxu0 0.0
  %233 = vmatprep.subr.mxu0 0.0
  %234 = vmatpush1.msra.mxu0 0.0
  %235 = vmatprep.subr.mxu0 0.0
  %236 = vmatpush1.msra.mxu0 0.0
  %237 = vmatprep.subr.mxu0 0.0
  %238 = vmatpush1.msra.mxu0 0.0
  %239 = vmatprep.subr.mxu0 0.0
  %240 = vmatpush1.msra.mxu0 0.0
  %241 = vmatprep.subr.mxu0 0.0
  %242 = vmatpush1.msra.mxu0 0.0
  %243 = vmatprep.subr.mxu0 0.0
  %244 = vmatpush1.msra.mxu0 0.0
  %245 = vmatprep.subr.mxu0 0.0
  %246 = vmatpush1.msra.mxu0 0.0
  %247 = vmatprep.subr.mxu0 0.0
  %248 = vmatpush1.msra.mxu0 0.0
  %249 = vmatprep.subr.mxu0 0.0
  %250 = vmatpush1.msra.mxu0 0.0
  %251 = vmatprep.subr.mxu0 0.0
  %252 = vmatpush1.msra.mxu0 0.0
  %253 = vmatprep.subr.mxu0 0.0
  %254 = vmatpush1.msra.mxu0 0.0
  %255 = vmatprep.subr.mxu0 0.0
  %256 = vmatpush1.msra.mxu0 0.0
  %257 = vmatprep.subr.mxu0 0.0
  %258 = vmatpush1.msra.mxu0 0.0
  %259 = vmatprep.subr.mxu0 0.0
  %260 = vmatpush1.msra.mxu0 0.0
  %261 = vmatprep.subr.mxu0 0.0
  %262 = vmatpush1.msra.mxu0 0.0
  %263 = vmatprep.subr.mxu0 0.0
  %264 = vmatpush1.msra.mxu0 0.0
  %265 = vmatprep.subr.mxu0 0.0
  %266 = vmatpush1.msra.mxu0 0.0
  %267 = vmatprep.subr.mxu0 0.0
  %268 = vmatpush1.msra.mxu0 0.0
  %269 = vmatprep.subr.mxu0 0.0
  %270 = vmatpush1.msra.mxu0 0.0
  %271 = vmatprep.subr.mxu0 0.0
  %272 = vmatpush1.msra.mxu0 0.0
  %273 = vmatprep.subr.mxu0 0.0
  %274 = vmatpush1.msra.mxu0 0.0
  %275 = vmatprep.subr.mxu0 0.0
  %276 = vmatpush1.msra.mxu0 0.0
  %277 = vmatprep.subr.mxu0 0.0
  %278 = vmatpush1.msra.mxu0 0.0
  %279 = vmatprep.subr.mxu0 0.0
  %280 = vmatpush1.msra.mxu0 0.0
  %281 = vmatprep.subr.mxu0 0.0
  %282 = vmatpush1.msra.mxu0 0.0
  %283 = vmatprep.subr.mxu0 0.0
  %284 = vmatpush1.msra.mxu0 0.0
  %285 = vmatprep.mubr.f32.mxu0 0.0
  %286 = vmatmul.mubr.f32.gmra.mrb[0].mxu0 %v212
  %v287 = vpop.f32.mrb[0].mxu0
  %v288 = vadd.f32 0.0, %v287
  %v289 = vpop.f32.mrb[0].mxu0
  %290 = vmatprep.mubr.f32.mxu0 0.0
  %291 = vmatmul.mubr.f32.gmra.mrb[0].mxu0 %v215
  %v292 = vpop.f32.mrb[0].mxu0
  %v293 = vadd.f32 0.0, %v292
  %v294 = vpop.f32.mrb[0].mxu0
  %295 = vdwg.mxu0
  %v296 = vadd.f32 %v199, %v288
  %v297 = vadd.f32 %v204, %v293
  %v298 = vld [vmem:[%s6] sm:$0x1]
  %v300 = vlaneseq
  %v301 = vshrl.u32 %v300, 7
  %v302 = vsub.s32 0, %v301
  %v303 = vrot.slane %v298, %v302
  %v305 = vadd.f32 %v296, %v303
  %v306 = vadd.f32 %v297, %v303
  %v307 = vmax.f32 %v305, 0.0
  %v308 = vmax.f32 %v306, 0.0
  %v309 = vld [vmem:[%s7] sm:$0xff]
  %v310 = vld [vmem:[%s7 + $0x8] sm:$0xff]
  %v311 = vld [vmem:[%s7 + $0x10] sm:$0xf]
  %v312 = vld [vmem:[%s8] sm:$0x1]
  %v314 = vlaneseq
  %v315 = vshrl.u32 %v314, 7
  %v316 = vsub.s32 0, %v315
  %v317 = vrot.slane %v312, %v316
  %vm319 = vcmask 162816
  %v321 = vsel %vm319, %v307, 0
  %v324 = vsel %vm319, %v308, 0
  %v327 = vsel %vm217, %v311, 0
  %329 = vmatprep.subr.mxu0 0.0
  %330 = vmatpush1.msra.mxu0 %v309
  %331 = vmatprep.subr.mxu0 0.0
  %332 = vmatpush1.msra.mxu0 %v310
  %333 = vmatprep.subr.mxu0 0.0
  %334 = vmatpush1.msra.mxu0 %v327
  %335 = vmatprep.subr.mxu0 0.0
  %336 = vmatpush1.msra.mxu0 0.0
  %337 = vmatprep.subr.mxu0 0.0
  %338 = vmatpush1.msra.mxu0 0.0
  %339 = vmatprep.subr.mxu0 0.0
  %340 = vmatpush1.msra.mxu0 0.0
  %341 = vmatprep.subr.mxu0 0.0
  %342 = vmatpush1.msra.mxu0 0.0
  %343 = vmatprep.subr.mxu0 0.0
  %344 = vmatpush1.msra.mxu0 0.0
  %345 = vmatprep.subr.mxu0 0.0
  %346 = vmatpush1.msra.mxu0 0.0
  %347 = vmatprep.subr.mxu0 0.0
  %348 = vmatpush1.msra.mxu0 0.0
  %349 = vmatprep.subr.mxu0 0.0
  %350 = vmatpush1.msra.mxu0 0.0
  %351 = vmatprep.subr.mxu0 0.0
  %352 = vmatpush1.msra.mxu0 0.0
  %353 = vmatprep.subr.mxu0 0.0
  %354 = vmatpush1.msra.mxu0 0.0
  %355 = vmatprep.subr.mxu0 0.0
  %356 = vmatpush1.msra.mxu0 0.0
  %357 = vmatprep.subr.mxu0 0.0
  %358 = vmatpush1.msra.mxu0 0.0
  %359 = vmatprep.subr.mxu0 0.0
  %360 = vmatpush1.msra.mxu0 0.0
  %361 = vmatprep.subr.mxu0 0.0
  %362 = vmatpush1.msra.mxu0 0.0
  %363 = vmatprep.subr.mxu0 0.0
  %364 = vmatpush1.msra.mxu0 0.0
  %365 = vmatprep.subr.mxu0 0.0
  %366 = vmatpush1.msra.mxu0 0.0
  %367 = vmatprep.subr.mxu0 0.0
  %368 = vmatpush1.msra.mxu0 0.0
  %369 = vmatprep.subr.mxu0 0.0
  %370 = vmatpush1.msra.mxu0 0.0
  %371 = vmatprep.subr.mxu0 0.0
  %372 = vmatpush1.msra.mxu0 0.0
  %373 = vmatprep.subr.mxu0 0.0
  %374 = vmatpush1.msra.mxu0 0.0
  %375 = vmatprep.subr.mxu0 0.0
  %376 = vmatpush1.msra.mxu0 0.0
  %377 = vmatprep.subr.mxu0 0.0
  %378 = vmatpush1.msra.mxu0 0.0
  %379 = vmatprep.subr.mxu0 0.0
  %380 = vmatpush1.msra.mxu0 0.0
  %381 = vmatprep.subr.mxu0 0.0
  %382 = vmatpush1.msra.mxu0 0.0
  %383 = vmatprep.subr.mxu0 0.0
  %384 = vmatpush1.msra.mxu0 0.0
  %385 = vmatprep.subr.mxu0 0.0
  %386 = vmatpush1.msra.mxu0 0.0
  %387 = vmatprep.subr.mxu0 0.0
  %388 = vmatpush1.msra.mxu0 0.0
  %389 = vmatprep.subr.mxu0 0.0
  %390 = vmatpush1.msra.mxu0 0.0
  %391 = vmatprep.subr.mxu0 0.0
  %392 = vmatpush1.msra.mxu0 0.0
  %393 = vmatprep.mubr.f32.mxu0 0.0
  %394 = vmatmul.mubr.f32.gmra.mrb[0].mxu0 %v321
  %v395 = vpop.f32.mrb[0].mxu0
  %v396 = vadd.f32 %v317, %v395
  %v397 = vpop.f32.mrb[0].mxu0
  %398 = vmatprep.mubr.f32.mxu0 0.0
  %399 = vmatmul.mubr.f32.gmra.mrb[0].mxu0 %v324
  %v400 = vpop.f32.mrb[0].mxu0
  %v401 = vadd.f32 %v317, %v400
  %v402 = vpop.f32.mrb[0].mxu0
  %403 = vdwg.mxu0
  %v404 = vmax.f32 %v396, 0.0
  %v405 = vmax.f32 %v401, 0.0
  %v406 = vld [vmem:[%s9] sm:$0xff]
  %v407 = vld [vmem:[%s9 + $0x8] sm:$0x7]
  %v408 = vld [vmem:[%s10] sm:$0x1]
  %v410 = vlaneseq
  %v411 = vshrl.u32 %v410, 7
  %v412 = vsub.s32 0, %v411
  %v413 = vrot.slane %v408, %v412
  %vm415 = vcmask 89088
  %v417 = vsel %vm415, %v404, 0
  %v420 = vsel %vm415, %v405, 0
  %vm422 = vcmask 1042432
  %v424 = vsel %vm422, %v407, 0
  %426 = vmatprep.subr.mxu0 0.0
  %427 = vmatpush1.msra.mxu0 %v406
  %428 = vmatprep.subr.mxu0 0.0
  %429 = vmatpush1.msra.mxu0 %v424
  %430 = vmatprep.subr.mxu0 0.0
  %431 = vmatpush1.msra.mxu0 0.0
  %432 = vmatprep.subr.mxu0 0.0
  %433 = vmatpush1.msra.mxu0 0.0
  %434 = vmatprep.subr.mxu0 0.0
  %435 = vmatpush1.msra.mxu0 0.0
  %436 = vmatprep.subr.mxu0 0.0
  %437 = vmatpush1.msra.mxu0 0.0
  %438 = vmatprep.subr.mxu0 0.0
  %439 = vmatpush1.msra.mxu0 0.0
  %440 = vmatprep.subr.mxu0 0.0
  %441 = vmatpush1.msra.mxu0 0.0
  %442 = vmatprep.subr.mxu0 0.0
  %443 = vmatpush1.msra.mxu0 0.0
  %444 = vmatprep.subr.mxu0 0.0
  %445 = vmatpush1.msra.mxu0 0.0
  %446 = vmatprep.subr.mxu0 0.0
  %447 = vmatpush1.msra.mxu0 0.0
  %448 = vmatprep.subr.mxu0 0.0
  %449 = vmatpush1.msra.mxu0 0.0
  %450 = vmatprep.subr.mxu0 0.0
  %451 = vmatpush1.msra.mxu0 0.0
  %452 = vmatprep.subr.mxu0 0.0
  %453 = vmatpush1.msra.mxu0 0.0
  %454 = vmatprep.subr.mxu0 0.0
  %455 = vmatpush1.msra.mxu0 0.0
  %456 = vmatprep.subr.mxu0 0.0
  %457 = vmatpush1.msra.mxu0 0.0
  %458 = vmatprep.subr.mxu0 0.0
  %459 = vmatpush1.msra.mxu0 0.0
  %460 = vmatprep.subr.mxu0 0.0
  %461 = vmatpush1.msra.mxu0 0.0
  %462 = vmatprep.subr.mxu0 0.0
  %463 = vmatpush1.msra.mxu0 0.0
  %464 = vmatprep.subr.mxu0 0.0
  %465 = vmatpush1.msra.mxu0 0.0
  %466 = vmatprep.subr.mxu0 0.0
  %467 = vmatpush1.msra.mxu0 0.0
  %468 = vmatprep.subr.mxu0 0.0
  %469 = vmatpush1.msra.mxu0 0.0
  %470 = vmatprep.subr.mxu0 0.0
  %471 = vmatpush1.msra.mxu0 0.0
  %472 = vmatprep.subr.mxu0 0.0
  %473 = vmatpush1.msra.mxu0 0.0
  %474 = vmatprep.subr.mxu0 0.0
  %475 = vmatpush1.msra.mxu0 0.0
  %476 = vmatprep.subr.mxu0 0.0
  %477 = vmatpush1.msra.mxu0 0.0
  %478 = vmatprep.subr.mxu0 0.0
  %479 = vmatpush1.msra.mxu0 0.0
  %480 = vmatprep.subr.mxu0 0.0
  %481 = vmatpush1.msra.mxu0 0.0
  %482 = vmatprep.subr.mxu0 0.0
  %483 = vmatpush1.msra.mxu0 0.0
  %484 = vmatprep.subr.mxu0 0.0
  %485 = vmatpush1.msra.mxu0 0.0
  %486 = vmatprep.subr.mxu0 0.0
  %487 = vmatpush1.msra.mxu0 0.0
  %488 = vmatprep.subr.mxu0 0.0
  %489 = vmatpush1.msra.mxu0 0.0
  %490 = vmatprep.mubr.f32.mxu0 0.0
  %491 = vmatmul.mubr.f32.gmra.mrb[0].mxu0 %v417
  %v492 = vpop.f32.mrb[0].mxu0
  %v493 = vadd.f32 %v413, %v492
  %v494 = vpop.f32.mrb[0].mxu0
  %495 = vmatprep.mubr.f32.mxu0 0.0
  %496 = vmatmul.mubr.f32.gmra.mrb[0].mxu0 %v420
  %v497 = vpop.f32.mrb[0].mxu0
  %v498 = vadd.f32 %v413, %v497
  %v499 = vpop.f32.mrb[0].mxu0
  %500 = vdwg.mxu0
  %vm501 = vcmask 23552
  %502 = vst.msk [vmem:[%s11] sm:$0xff] %vm501, %v493
  %503 = vst.msk [vmem:[%s11 + $0x8] sm:$0xff] %vm501, %v498
  // Predicated region
  $region46: #{tpu_custom_call.1} parent=0 // pred_check
    _
  $region47: #{tpu_custom_call.1} parent=0 // pred_check_branch
    %505 = sbr.rel (0) target = $region49
  $region48: #{tpu_custom_call.1} parent=0 // pred_region
    _
  $region49: #{tpu_custom_call.1} parent=0 // pred_fallthru
    _
  // Predicated region
  $region50: #{tpu_custom_call.1} parent=0 // pred_check
    _
  $region51: #{tpu_custom_call.1} parent=0 // pred_check_branch
    %507 = sbr.rel (0) target = $region53
  $region52: #{tpu_custom_call.1} parent=0 // pred_region
    _
  $region53: #{tpu_custom_call.1} parent=0 // pred_fallthru
    _

</llo_original>
